<compile_context>
chip_gen: v7x
topology: tpu7x:2x2x1
jax: 0.10.0
libtpu: 0.0.40
codegen_flags: <defaults>
</compile_context>

<pallas_src>
import functools

import jax
import jax.numpy as jnp
from jax import lax
from jax.experimental import pallas as pl
from jax.experimental.pallas import tpu as pltpu


def _disc_kernel(x_ref, w1_ref, b1_ref, w2_ref, b2_ref, w3_ref, b3_ref,
                 out_ref, *, chunk, n_chunks, vpu_head):
    """One batch tile, feature-major (hidden on sublanes, batch on lanes)."""
    w1 = w1_ref[...]                      # (hid, in)   bf16
    b1 = b1_ref[...]                      # (hid, 1)    f32
    w2 = w2_ref[...]                      # (hid, hid)  bf16
    b2 = b2_ref[...]                      # (hid, 1)    f32
    w3 = w3_ref[...]                      # (hid, 1) f32   |  (out, hid) bf16
    b3 = b3_ref[...]                      # (out, 1)    f32

    def body(c, carry):
        col = pl.multiple_of(c * chunk, chunk)
        # x streams as f32 (HBM-bound); cast to bf16 only here, right before
        # the MXU dot (native MXU input dtype on every generation).
        xc = x_ref[pl.ds(col, chunk), :].astype(jnp.bfloat16)    # (chunk, in)

        # Layer 1: (hid, in) . (chunk, in)^T -> (hid, chunk), f32 accumulate.
        # TODO(synk): if the upstream producer can emit x feature-major
        # (in, B), switch to a plain (hid,in)@(in,chunk) dot and drop the
        # in-kernel transpose; a standalone wrapper transpose would cost an
        # extra HBM pass, so it is intentionally not added here.
        h = lax.dot_general(w1, xc, (((1,), (1,)), ((), ())),
                            preferred_element_type=jnp.float32)
        h = h + b1                                    # (hid, 1) broadcast
        h = jnp.where(h >= 0, h, 0.2 * h)             # LeakyReLU(0.2), f32

        # Layer 2: (hid, hid) @ (hid, chunk) -> (hid, chunk).
        h = jnp.dot(w2, h.astype(jnp.bfloat16),
                    preferred_element_type=jnp.float32)
        h = h + b2
        h = jnp.where(h >= 0, h, 0.2 * h)

        # Layer 3 (+ sigmoid).
        if vpu_head:
            # out_features == 1: VPU broadcast-multiply + XLU sublane reduce
            # instead of wasting an MXU pass on N = 1.
            logits = jnp.sum(h * w3, axis=0, keepdims=True) + b3
        else:
            logits = jnp.dot(w3, h.astype(jnp.bfloat16),
                             preferred_element_type=jnp.float32) + b3

        # Sigmoid: exp + approx reciprocal on the EUP slot; clamp because the
        # approx reciprocal can overshoot 1 by ~1e-3.
        s = pl.reciprocal(1.0 + jnp.exp(-logits), approx=True)
        out_ref[:, pl.ds(col, chunk)] = jnp.clip(s, 0.0, 1.0)
        return carry

    lax.fori_loop(0, n_chunks, body, 0, unroll=True)


def discriminator_forward(x, params, *, tile_b=4096):
    """x: [B, input_size] float32. params: PyTorch-shaped Linear weights."""
    w1, b1 = params["w1"], params["b1"]   # w1: [hid, in],  b1: [hid]
    w2, b2 = params["w2"], params["b2"]   # w2: [hid, hid], b2: [hid]
    w3, b3 = params["w3"], params["b3"]   # w3: [out, hid], b3: [out]

    B, in_size = x.shape
    hid = w1.shape[0]
    out_size = w3.shape[0]

    def round_up(a, m):
        return -(-a // m) * m

    # Batch tile: multiple of 256 (MXU-friendly on all gens).  Default 4096
    # keeps per-step DMA >> per-step overhead while the double-buffered f32 x
    # tile stays under v5e's 16 MiB default scoped VMEM.
    tb = round_up(min(max(tile_b, 256), round_up(B, 256)), 256)
    # v7x megacore: keep >= 2 grid steps whenever the batch allows it so the
    # "parallel" axis can be sharded across both TensorCores.
    if B > 512 and pl.cdiv(B, tb) < 2:
        tb = round_up(pl.cdiv(B, 2), 256)

    n_steps = pl.cdiv(B, tb)
    b_pad = n_steps * tb

    # In-tile lane-chunk size: keeps h at (hid, chunk) f32 in registers.
    chunk = 512 if tb % 512 == 0 else 256
    n_chunks = tb // chunk

    # No padded copy of x (that would be a full extra HBM pass): when B >= tb
    # the last block is simply ragged — out-of-bounds rows read stale VMEM and
    # their outputs are sliced off.  Tiny batches get a cheap pad instead.
    x_in = jnp.pad(x, ((0, tb - B), (0, 0))) if B < tb else x

    # Weights/biases are KB-sized: wrapper casts/reshapes here are noise.
    w1b = w1.astype(jnp.bfloat16)
    w2b = w2.astype(jnp.bfloat16)
    b1c = b1.reshape(hid, 1).astype(jnp.float32)
    b2c = b2.reshape(hid, 1).astype(jnp.float32)
    b3c = b3.reshape(out_size, 1).astype(jnp.float32)

    vpu_head = (out_size == 1)
    w3k = w3.T.astype(jnp.float32) if vpu_head else w3.astype(jnp.bfloat16)

    kernel = functools.partial(_disc_kernel, chunk=chunk, n_chunks=n_chunks,
                               vpu_head=vpu_head)

    def resident(a):
        # Whole-array block, same block index every step: Pallas skips the
        # re-DMA after step 0 (Buffered(1) hint omitted — savings are a few KB).
        return pl.BlockSpec(a.shape, lambda i: (0,) * a.ndim)

    out_t = pl.pallas_call(
        kernel,
        out_shape=jax.ShapeDtypeStruct((out_size, b_pad), jnp.float32),
        grid=(n_steps,),
        in_specs=[
            pl.BlockSpec((tb, in_size), lambda i: (i, 0)),   # x: streamed f32
            resident(w1b), resident(b1c),
            resident(w2b), resident(b2c),
            resident(w3k), resident(b3c),
        ],
        out_specs=pl.BlockSpec((out_size, tb), lambda i: (0, i)),
        compiler_params=pltpu.CompilerParams(
            dimension_semantics=("parallel",)),
    )(x_in, w1b, b1c, w2b, b2c, w3k, b3c)

    # Back to the PyTorch layout (B, out_size); padded/ragged columns dropped.
    return out_t[:, :B].T.astype(x.dtype)


def init_params(key, input_size, hidden_size, output_size):
    """Deterministic synthetic params, PyTorch Linear shapes ([out, in], [out])."""
    ks = jax.random.split(key, 6)

    def lin(kw, kb, fan_in, fan_out):
        bound = 1.0 / jnp.sqrt(fan_in)
        w = jax.random.uniform(kw, (fan_out, fan_in), jnp.float32, -bound, bound)
        b = jax.random.uniform(kb, (fan_out,), jnp.float32, -bound, bound)
        return w, b

    w1, b1 = lin(ks[0], ks[1], input_size, hidden_size)
    w2, b2 = lin(ks[2], ks[3], hidden_size, hidden_size)
    w3, b3 = lin(ks[4], ks[5], hidden_size, output_size)
    return {"w1": w1, "b1": b1, "w2": w2, "b2": b2, "w3": w3, "b3": b3}


def reference_forward(x, p):
    h = x @ p["w1"].T + p["b1"]
    h = jnp.where(h >= 0, h, 0.2 * h)
    h = h @ p["w2"].T + p["b2"]
    h = jnp.where(h >= 0, h, 0.2 * h)
    h = h @ p["w3"].T + p["b3"]
    return jax.nn.sigmoid(h)


if __name__ == "__main__":
    input_size, hidden_size, output_size = 64, 32, 1

    key = jax.random.PRNGKey(0)
    kx, kp, kx2 = jax.random.split(key, 3)
    params = init_params(kp, input_size, hidden_size, output_size)

    # Small batch: single grid step, cheaply padded tile.
    x = jax.random.normal(kx, (8, input_size), jnp.float32)
    out = jax.block_until_ready(discriminator_forward(x, params))
    ref = reference_forward(x, params)
    assert out.shape == (8, output_size)
    # Tolerance accounts for bf16 matmul inputs + approx EUP reciprocal.
    assert jnp.allclose(out, ref, atol=2e-2, rtol=2e-2), "mismatch (small batch)"

    # Multi-step grid with a ragged last block (no padded x copy).
    x2 = jax.random.normal(kx2, (600, input_size), jnp.float32)
    out2 = jax.block_until_ready(discriminator_forward(x2, params))
    ref2 = reference_forward(x2, params)
    assert out2.shape == (600, output_size)
    assert jnp.allclose(out2, ref2, atol=2e-2, rtol=2e-2), "mismatch (ragged batch)"

    print("KERNEL_OK")
</pallas_src>

<mosaic_0001>
module attributes {stable_mosaic.version = 11 : i64} {
  func.func @_disc_kernel(%arg0: i32, %arg1: memref<256x64xf32, #tpu.memory_space<vmem>>, %arg2: memref<32x64xbf16, #tpu.memory_space<vmem>>, %arg3: memref<32x1xf32, #tpu.memory_space<vmem>>, %arg4: memref<32x32xbf16, #tpu.memory_space<vmem>>, %arg5: memref<32x1xf32, #tpu.memory_space<vmem>>, %arg6: memref<32x1xf32, #tpu.memory_space<vmem>>, %arg7: memref<1x1xf32, #tpu.memory_space<vmem>>, %arg8: memref<1x256xf32, #tpu.memory_space<vmem>>) attributes {dimension_semantics = [#tpu.dimension_semantics<parallel>], iteration_bounds = array<i64: 1>, scalar_prefetch = 0 : i64, scratch_operands = 0 : i64, tpu.core_type = #tpu.core_type<tc>, window_params = [{transform_indices = @transform_0, window_bounds = array<i64: 256, 64>}, {pipeline_mode = #tpu.pipeline_mode<synchronous>, transform_indices = @transform_1, window_bounds = array<i64: 32, 64>}, {pipeline_mode = #tpu.pipeline_mode<synchronous>, transform_indices = @transform_2, window_bounds = array<i64: 32, 1>}, {pipeline_mode = #tpu.pipeline_mode<synchronous>, transform_indices = @transform_3, window_bounds = array<i64: 32, 32>}, {pipeline_mode = #tpu.pipeline_mode<synchronous>, transform_indices = @transform_4, window_bounds = array<i64: 32, 1>}, {pipeline_mode = #tpu.pipeline_mode<synchronous>, transform_indices = @transform_5, window_bounds = array<i64: 32, 1>}, {pipeline_mode = #tpu.pipeline_mode<synchronous>, transform_indices = @transform_6, window_bounds = array<i64: 1, 1>}, {transform_indices = @transform_7, window_bounds = array<i64: 1, 256>}]} {
    %c0 = arith.constant 0 : index
    %c0_0 = arith.constant 0 : index
    %0 = vector.load %arg2[%c0, %c0_0] : memref<32x64xbf16, #tpu.memory_space<vmem>>, vector<32x64xbf16>
    %c0_1 = arith.constant 0 : index
    %c0_2 = arith.constant 0 : index
    %1 = vector.load %arg3[%c0_1, %c0_2] : memref<32x1xf32, #tpu.memory_space<vmem>>, vector<32x1xf32>
    %c0_3 = arith.constant 0 : index
    %c0_4 = arith.constant 0 : index
    %2 = vector.load %arg4[%c0_3, %c0_4] : memref<32x32xbf16, #tpu.memory_space<vmem>>, vector<32x32xbf16>
    %c0_5 = arith.constant 0 : index
    %c0_6 = arith.constant 0 : index
    %3 = vector.load %arg5[%c0_5, %c0_6] : memref<32x1xf32, #tpu.memory_space<vmem>>, vector<32x1xf32>
    %c0_7 = arith.constant 0 : index
    %c0_8 = arith.constant 0 : index
    %4 = vector.load %arg6[%c0_7, %c0_8] : memref<32x1xf32, #tpu.memory_space<vmem>>, vector<32x1xf32>
    %c0_9 = arith.constant 0 : index
    %c0_10 = arith.constant 0 : index
    %5 = vector.load %arg7[%c0_9, %c0_10] : memref<1x1xf32, #tpu.memory_space<vmem>>, vector<1x1xf32>
    %c0_i32 = arith.constant 0 : i32
    %c256_i32 = arith.constant 256 : i32
    %6 = arith.muli %c0_i32, %c256_i32 : i32
    %7 = tpu.assume_multiple %6, 256 : i32
    %8 = arith.index_cast %7 : i32 to index
    %c0_11 = arith.constant 0 : index
    %9 = vector.load %arg1[%8, %c0_11] : memref<256x64xf32, #tpu.memory_space<vmem>>, vector<256x64xf32>
    %10 = arith.truncf %9 : vector<256x64xf32> to vector<256x64xbf16>
    %cst = arith.constant dense<0.000000e+00> : vector<32x256xf32>
    %11 = tpu.matmul %0, %10, %cst {dimension_numbers = #tpu.dot_dimension_numbers<[1], [1], [0], [0], [0, 0, 1, 0], [], []>} : vector<32x64xbf16>, vector<256x64xbf16>, vector<32x256xf32> -> vector<32x256xf32>
    %12 = vector.broadcast %1 : vector<32x1xf32> to vector<32x256xf32>
    %13 = arith.addf %11, %12 : vector<32x256xf32>
    %cst_12 = arith.constant 0.000000e+00 : f32
    %14 = vector.broadcast %cst_12 : f32 to vector<32x256xf32>
    %15 = arith.cmpf oge, %13, %14 : vector<32x256xf32>
    %cst_13 = arith.constant 2.000000e-01 : f32
    %16 = vector.broadcast %cst_13 : f32 to vector<32x256xf32>
    %17 = arith.mulf %16, %13 : vector<32x256xf32>
    %18 = arith.select %15, %13, %17 : vector<32x256xi1>, vector<32x256xf32>
    %19 = arith.truncf %18 : vector<32x256xf32> to vector<32x256xbf16>
    %cst_14 = arith.constant dense<0.000000e+00> : vector<32x256xf32>
    %20 = tpu.matmul %2, %19, %cst_14 {dimension_numbers = #tpu.dot_dimension_numbers<[1], [0], [0], [1], [0, 0, 1, 1], [], []>} : vector<32x32xbf16>, vector<32x256xbf16>, vector<32x256xf32> -> vector<32x256xf32>
    %21 = vector.broadcast %3 : vector<32x1xf32> to vector<32x256xf32>
    %22 = arith.addf %20, %21 : vector<32x256xf32>
    %cst_15 = arith.constant 0.000000e+00 : f32
    %23 = vector.broadcast %cst_15 : f32 to vector<32x256xf32>
    %24 = arith.cmpf oge, %22, %23 : vector<32x256xf32>
    %cst_16 = arith.constant 2.000000e-01 : f32
    %25 = vector.broadcast %cst_16 : f32 to vector<32x256xf32>
    %26 = arith.mulf %25, %22 : vector<32x256xf32>
    %27 = arith.select %24, %22, %26 : vector<32x256xi1>, vector<32x256xf32>
    %28 = vector.broadcast %4 : vector<32x1xf32> to vector<32x256xf32>
    %29 = arith.mulf %27, %28 : vector<32x256xf32>
    %cst_17 = arith.constant dense<0.000000e+00> : vector<256xf32>
    %30 = vector.multi_reduction <add>, %29, %cst_17 [0] : vector<32x256xf32> to vector<256xf32>
    %31 = vector.shape_cast %30 : vector<256xf32> to vector<1x256xf32>
    %32 = vector.broadcast %5 : vector<1x1xf32> to vector<1x256xf32>
    %33 = arith.addf %31, %32 : vector<1x256xf32>
    %cst_18 = arith.constant 0.000000e+00 : f32
    %34 = vector.broadcast %cst_18 : f32 to vector<1x256xf32>
    %35 = arith.subf %34, %33 : vector<1x256xf32>
    %36 = math.exp %35 : vector<1x256xf32>
    %cst_19 = arith.constant 1.000000e+00 : f32
    %37 = vector.broadcast %cst_19 : f32 to vector<1x256xf32>
    %38 = arith.addf %37, %36 : vector<1x256xf32>
    %39 = tpu.reciprocal %38 {approx = true} : vector<1x256xf32> -> vector<1x256xf32>
    %cst_20 = arith.constant 0.000000e+00 : f32
    %cst_21 = arith.constant 1.000000e+00 : f32
    %40 = vector.broadcast %cst_20 : f32 to vector<1x256xf32>
    %41 = arith.maximumf %40, %39 : vector<1x256xf32>
    %42 = vector.broadcast %cst_21 : f32 to vector<1x256xf32>
    %43 = arith.minimumf %42, %41 : vector<1x256xf32>
    %c0_22 = arith.constant 0 : index
    %44 = arith.index_cast %7 : i32 to index
    %45 = vector.load %arg8[%c0_22, %44] : memref<1x256xf32, #tpu.memory_space<vmem>>, vector<1x256xf32>
    tpu.vector_store %arg8[%c0_22, %44], %43 {strides = array<i32>} : memref<1x256xf32, #tpu.memory_space<vmem>>, vector<1x256xf32>,
    %c1_i32 = arith.constant 1 : i32
    return
  }
  func.func @transform_0(%arg0: i32) -> (i32, i32) {
    %c0_i32 = arith.constant 0 : i32
    %c0_i32_0 = arith.constant 0 : i32
    return %arg0, %c0_i32 : i32, i32
  }
  func.func @transform_1(%arg0: i32) -> (i32, i32) {
    %c0_i32 = arith.constant 0 : i32
    %c0_i32_0 = arith.constant 0 : i32
    %c0_i32_1 = arith.constant 0 : i32
    return %c0_i32, %c0_i32_0 : i32, i32
  }
  func.func @transform_2(%arg0: i32) -> (i32, i32) {
    %c0_i32 = arith.constant 0 : i32
    %c0_i32_0 = arith.constant 0 : i32
    %c0_i32_1 = arith.constant 0 : i32
    return %c0_i32, %c0_i32_0 : i32, i32
  }
  func.func @transform_3(%arg0: i32) -> (i32, i32) {
    %c0_i32 = arith.constant 0 : i32
    %c0_i32_0 = arith.constant 0 : i32
    %c0_i32_1 = arith.constant 0 : i32
    return %c0_i32, %c0_i32_0 : i32, i32
  }
  func.func @transform_4(%arg0: i32) -> (i32, i32) {
    %c0_i32 = arith.constant 0 : i32
    %c0_i32_0 = arith.constant 0 : i32
    %c0_i32_1 = arith.constant 0 : i32
    return %c0_i32, %c0_i32_0 : i32, i32
  }
  func.func @transform_5(%arg0: i32) -> (i32, i32) {
    %c0_i32 = arith.constant 0 : i32
    %c0_i32_0 = arith.constant 0 : i32
    %c0_i32_1 = arith.constant 0 : i32
    return %c0_i32, %c0_i32_0 : i32, i32
  }
  func.func @transform_6(%arg0: i32) -> (i32, i32) {
    %c0_i32 = arith.constant 0 : i32
    %c0_i32_0 = arith.constant 0 : i32
    %c0_i32_1 = arith.constant 0 : i32
    return %c0_i32, %c0_i32_0 : i32, i32
  }
  func.func @transform_7(%arg0: i32) -> (i32, i32) {
    %c0_i32 = arith.constant 0 : i32
    %c0_i32_0 = arith.constant 0 : i32
    return %c0_i32, %arg0 : i32, i32
  }
}

</mosaic_0001>

<llo_original>
// kernel: tpu_custom_call.1
$region0: #{tpu_custom_call.1}
  #allocation0 [shape = 'u32[]', space=smem, size = 0x4, offset = 0x4, fixed_abs, tag = 'smem constant byte address 0x4 - core index']
  #allocation1 [shape = 'u32[144,128]{1,0:T(1,128)}', space=vmem, size = 0x12000, scoped, tag = 'internal scratch']
  #allocation2 [shape = 'f32[1,1]{1,0:T(1,128)S(1)}', space=vmem, size = 0x200, scoped, tag = 'scoped memory for tpu_custom_call.1']
  %s0 = inlined_call_operand.vmem [shape: f32[256,64], index: 0, kind: input, shape index: {}]
  %s1 = inlined_call_operand.vmem [shape: bf16[32,64], index: 1, kind: input, shape index: {}]
  %s2 = inlined_call_operand.vmem [shape: f32[32,1], index: 2, kind: input, shape index: {}]
  %s3 = inlined_call_operand.vmem [shape: bf16[32,32], index: 3, kind: input, shape index: {}]
  %s4 = inlined_call_operand.vmem [shape: f32[32,1], index: 4, kind: input, shape index: {}]
  %s5 = inlined_call_operand.vmem [shape: f32[32,1], index: 5, kind: input, shape index: {}]
  %s6 = inlined_call_operand.<no memory space> [shape: f32[1,1], index: 6, kind: input, shape index: {}]
  %s7 = inlined_call_operand.hbm [shape: f32[1,256], index: 7, kind: output, shape index: {}]
  %s8 = sld [smem:[#allocation0]]
  $region38: #{tpu_custom_call.1} parent=0
    _
  %s10 = ssub.s32 1, %s8
  %s11 = scalar_select 0, %s10, %s8
  %v12 = vstv %s6
  %13 = vst [vmem:[#allocation2] sm:$0x1] %v12
  $region1: #{tpu_custom_call.1} parent=0
    #allocation3 [shape = 'u8[1024]{0}', space=vmem, size = 0x400, scoped, tag = 'output window, operand 0, single buffered']
    #allocation4 [shape = 's32[1]{0}', space=sflag, size = 0x4, scoped, tag = 'scoped memory for tpu_custom_call.1']
    %14 = vsyncpa [#allocation4], 0
    // Predicated region
    $region2: #{tpu_custom_call.1} parent=1 // pred_check
      _
    $region3: #{tpu_custom_call.1} parent=1 // pred_check_branch
      %16 = sbr.rel (0) target = $region5
    $region4: #{tpu_custom_call.1} parent=1 // pred_region
      _
    $region5: #{tpu_custom_call.1} parent=1 // pred_fallthru
      _
    // Predicated region
    $region6: #{tpu_custom_call.1} parent=1 // pred_check
      _
    $region7: #{tpu_custom_call.1} parent=1 // pred_check_branch
      %18 = sbr.rel (0) target = $region9
    $region8: #{tpu_custom_call.1} parent=1 // pred_region
      _
    $region9: #{tpu_custom_call.1} parent=1 // pred_fallthru
      _
    // Predicated region
    $region10: #{tpu_custom_call.1} parent=1 // pred_check
      _
    $region11: #{tpu_custom_call.1} parent=1 // pred_check_branch
      %20 = sbr.rel (0) target = $region13
    $region12: #{tpu_custom_call.1} parent=1 // pred_region
      _
    $region13: #{tpu_custom_call.1} parent=1 // pred_fallthru
      _
    // Predicated region
    $region14: #{tpu_custom_call.1} parent=1 // pred_check
      _
    $region15: #{tpu_custom_call.1} parent=1 // pred_check_branch
      %22 = sbr.rel (0) target = $region17
    $region16: #{tpu_custom_call.1} parent=1 // pred_region
      _
    $region17: #{tpu_custom_call.1} parent=1 // pred_fallthru
      _
    // Predicated region
    $region18: #{tpu_custom_call.1} parent=1 // pred_check
      _
    $region19: #{tpu_custom_call.1} parent=1 // pred_check_branch
      %24 = sbr.rel (0) target = $region21
    $region20: #{tpu_custom_call.1} parent=1 // pred_region
      _
    $region21: #{tpu_custom_call.1} parent=1 // pred_fallthru
      _
    // Predicated region
    $region22: #{tpu_custom_call.1} parent=1 // pred_check
      _
    $region23: #{tpu_custom_call.1} parent=1 // pred_check_branch
      %26 = sbr.rel (0) target = $region25
    $region24: #{tpu_custom_call.1} parent=1 // pred_region
      _
    $region25: #{tpu_custom_call.1} parent=1 // pred_fallthru
      _
    // Predicated region
    $region26: #{tpu_custom_call.1} parent=1 // pred_check
      _
    $region27: #{tpu_custom_call.1} parent=1 // pred_check_branch
      %28 = sbr.rel (0) target = $region29
    $region28: #{tpu_custom_call.1} parent=1 // pred_region
      _
    $region29: #{tpu_custom_call.1} parent=1 // pred_fallthru
      _
    %v30 = vld [vmem:[%s1] sm:$0xf]
    %v31 = vld [vmem:[%s1 + $0x4] sm:$0xf]
    %v32 = vld [vmem:[%s1 + $0x8] sm:$0xf]
    %v33 = vld [vmem:[%s1 + $0xc] sm:$0xf]
    %v34 = vld [vmem:[%s2] sm:$0xff]
    %v35 = vld [vmem:[%s2 + $0x8] sm:$0xff]
    %v36 = vld [vmem:[%s2 + $0x10] sm:$0xff]
    %v37 = vld [vmem:[%s2 + $0x18] sm:$0xff]
    %v38 = vld [vmem:[%s3] sm:$0xf]
    %v39 = vld [vmem:[%s3 + $0x4] sm:$0xf]
    %v40 = vld [vmem:[%s3 + $0x8] sm:$0xf]
    %v41 = vld [vmem:[%s3 + $0xc] sm:$0xf]
    %v42 = vld [vmem:[%s4] sm:$0xff]
    %v43 = vld [vmem:[%s4 + $0x8] sm:$0xff]
    %v44 = vld [vmem:[%s4 + $0x10] sm:$0xff]
    %v45 = vld [vmem:[%s4 + $0x18] sm:$0xff]
    %v46 = vld [vmem:[%s5] sm:$0xff]
    %v47 = vld [vmem:[%s5 + $0x8] sm:$0xff]
    %v48 = vld [vmem:[%s5 + $0x10] sm:$0xff]
    %v49 = vld [vmem:[%s5 + $0x18] sm:$0xff]
    %v50 = vld [vmem:[#allocation2] sm:$0x1]
    %v51 = vld [vmem:[%s0] sm:$0xff]
    %v52 = vld [vmem:[%s0 + $0x8] sm:$0xff]
    %v53 = vld [vmem:[%s0 + $0x10] sm:$0xff]
    %v54 = vld [vmem:[%s0 + $0x18] sm:$0xff]
    %v55 = vld [vmem:[%s0 + $0x20] sm:$0xff]
    %v56 = vld [vmem:[%s0 + $0x28] sm:$0xff]
    %v57 = vld [vmem:[%s0 + $0x30] sm:$0xff]
    %v58 = vld [vmem:[%s0 + $0x38] sm:$0xff]
    %v59 = vld [vmem:[%s0 + $0x40] sm:$0xff]
    %v60 = vld [vmem:[%s0 + $0x48] sm:$0xff]
    %v61 = vld [vmem:[%s0 + $0x50] sm:$0xff]
    %v62 = vld [vmem:[%s0 + $0x58] sm:$0xff]
    %v63 = vld [vmem:[%s0 + $0x60] sm:$0xff]
    %v64 = vld [vmem:[%s0 + $0x68] sm:$0xff]
    %v65 = vld [vmem:[%s0 + $0x70] sm:$0xff]
    %v66 = vld [vmem:[%s0 + $0x78] sm:$0xff]
    %v67 = vld [vmem:[%s0 + $0x80] sm:$0xff]
    %v68 = vld [vmem:[%s0 + $0x88] sm:$0xff]
    %v69 = vld [vmem:[%s0 + $0x90] sm:$0xff]
    %v70 = vld [vmem:[%s0 + $0x98] sm:$0xff]
    %v71 = vld [vmem:[%s0 + $0xa0] sm:$0xff]
    %v72 = vld [vmem:[%s0 + $0xa8] sm:$0xff]
    %v73 = vld [vmem:[%s0 + $0xb0] sm:$0xff]
    %v74 = vld [vmem:[%s0 + $0xb8] sm:$0xff]
    %v75 = vld [vmem:[%s0 + $0xc0] sm:$0xff]
    %v76 = vld [vmem:[%s0 + $0xc8] sm:$0xff]
    %v77 = vld [vmem:[%s0 + $0xd0] sm:$0xff]
    %v78 = vld [vmem:[%s0 + $0xd8] sm:$0xff]
    %v79 = vld [vmem:[%s0 + $0xe0] sm:$0xff]
    %v80 = vld [vmem:[%s0 + $0xe8] sm:$0xff]
    %v81 = vld [vmem:[%s0 + $0xf0] sm:$0xff]
    %v82 = vld [vmem:[%s0 + $0xf8] sm:$0xff]
    %v83 = vpack.c.bf16 %v52, %v51
    %v84 = vpack.c.bf16 %v54, %v53
    %v85 = vpack.c.bf16 %v56, %v55
    %v86 = vpack.c.bf16 %v58, %v57
    %v87 = vpack.c.bf16 %v60, %v59
    %v88 = vpack.c.bf16 %v62, %v61
    %v89 = vpack.c.bf16 %v64, %v63
    %v90 = vpack.c.bf16 %v66, %v65
    %v91 = vpack.c.bf16 %v68, %v67
    %v92 = vpack.c.bf16 %v70, %v69
    %v93 = vpack.c.bf16 %v72, %v71
    %v94 = vpack.c.bf16 %v74, %v73
    %v95 = vpack.c.bf16 %v76, %v75
    %v96 = vpack.c.bf16 %v78, %v77
    %v97 = vpack.c.bf16 %v80, %v79
    %v98 = vpack.c.bf16 %v82, %v81
    %100 = vset.pattern.permute.xlu0 0
    %101 = vperm.xlu0 %100, %v34
    %v102 = vpop.permute.xlu0 %101
    %105 = vset.pattern.permute.xlu0 0
    %106 = vperm.xlu0 %105, %v35
    %v107 = vpop.permute.xlu0 %106
    %110 = vset.pattern.permute.xlu0 0
    %111 = vperm.xlu0 %110, %v36
    %v112 = vpop.permute.xlu0 %111
    %115 = vset.pattern.permute.xlu0 0
    %116 = vperm.xlu0 %115, %v37
    %v117 = vpop.permute.xlu0 %116
    %v123 = vunpack.c.l.b16 %v30
    %v124 = vunpack.c.l.b16 %v31
    %v125 = vunpack.c.l.b16 %v32
    %v126 = vunpack.c.l.b16 %v33
    %v127 = vpack.c.b16 %v124, %v123
    %v128 = vpack.c.b16 %v126, %v125
    %vm129 = vcmask 523264
    %v131 = vsel %vm129, %v127, 0
    %v134 = vsel %vm129, %v128, 0
    %v137 = vsel %vm129, %v83, 0
    %v140 = vsel %vm129, %v84, 0
    %v143 = vsel %vm129, %v85, 0
    %v146 = vsel %vm129, %v86, 0
    %v149 = vsel %vm129, %v87, 0
    %v152 = vsel %vm129, %v88, 0
    %v155 = vsel %vm129, %v89, 0
    %v158 = vsel %vm129, %v90, 0
    %v161 = vsel %vm129, %v91, 0
    %v164 = vsel %vm129, %v92, 0
    %v167 = vsel %vm129, %v93, 0
    %v170 = vsel %vm129, %v94, 0
    %v173 = vsel %vm129, %v95, 0
    %v176 = vsel %vm129, %v96, 0
    %v179 = vsel %vm129, %v97, 0
    %v182 = vsel %vm129, %v98, 0
    %184 = vmatprep.subr.bf16.mxu0 0
    %185 = vmatpush1.bf16.xpose.msra.mxu0 %v137
    %186 = vmatprep.subr.bf16.mxu0 0
    %187 = vmatpush1.bf16.xpose.msra.mxu0 %v140
    %188 = vmatprep.subr.bf16.mxu0 0
    %189 = vmatpush1.bf16.xpose.msra.mxu0 %v143
    %190 = vmatprep.subr.bf16.mxu0 0
    %191 = vmatpush1.bf16.xpose.msra.mxu0 %v146
    %192 = vmatprep.subr.bf16.mxu0 0
    %193 = vmatpush1.bf16.xpose.msra.mxu0 %v149
    %194 = vmatprep.subr.bf16.mxu0 0
    %195 = vmatpush1.bf16.xpose.msra.mxu0 %v152
    %196 = vmatprep.subr.bf16.mxu0 0
    %197 = vmatpush1.bf16.xpose.msra.mxu0 %v155
    %198 = vmatprep.subr.bf16.mxu0 0
    %199 = vmatpush1.bf16.xpose.msra.mxu0 %v158
    %200 = vmatprep.subr.bf16.mxu0 0
    %201 = vmatpush1.bf16.xpose.msra.mxu0 %v161
    %202 = vmatprep.subr.bf16.mxu0 0
    %203 = vmatpush1.bf16.xpose.msra.mxu0 %v164
    %204 = vmatprep.subr.bf16.mxu0 0
    %205 = vmatpush1.bf16.xpose.msra.mxu0 %v167
    %206 = vmatprep.subr.bf16.mxu0 0
    %207 = vmatpush1.bf16.xpose.msra.mxu0 %v170
    %208 = vmatprep.subr.bf16.mxu0 0
    %209 = vmatpush1.bf16.xpose.msra.mxu0 %v173
    %210 = vmatprep.subr.bf16.mxu0 0
    %211 = vmatpush1.bf16.xpose.msra.mxu0 %v176
    %212 = vmatprep.subr.bf16.mxu0 0
    %213 = vmatpush1.bf16.xpose.msra.mxu0 %v179
    %214 = vmatprep.subr.bf16.mxu0 0
    %215 = vmatpush1.bf16.xpose.msra.mxu0 %v182
    %216 = vmatprep.mubr.bf16.mxu0 0
    %217 = vmatmul.mubr.bf16.gmra.mrb[0].mxu0 %v131
    %v218 = vpop.f32.mrb[0].mxu0
    %v219 = vadd.f32 %v102, %v218
    %v220 = vpop.f32.mrb[0].mxu0
    %v221 = vadd.f32 %v102, %v220
    %v222 = vpop.f32.mrb[0].mxu0
    %v223 = vadd.f32 %v107, %v222
    %v224 = vpop.f32.mrb[0].mxu0
    %v225 = vadd.f32 %v107, %v224
    %226 = vmatprep.mubr.bf16.mxu0 0
    %227 = vmatmul.mubr.bf16.gmra.mrb[0].mxu0 %v134
    %v228 = vpop.f32.mrb[0].mxu0
    %v229 = vadd.f32 %v112, %v228
    %v230 = vpop.f32.mrb[0].mxu0
    %v231 = vadd.f32 %v112, %v230
    %v232 = vpop.f32.mrb[0].mxu0
    %v233 = vadd.f32 %v117, %v232
    %v234 = vpop.f32.mrb[0].mxu0
    %v235 = vadd.f32 %v117, %v234
    %236 = vdwg.mxu0
    %vm237 = vcmp.ge.f32.partialorder %v219, 0.0
    %vm238 = vcmp.ge.f32.partialorder %v221, 0.0
    %vm239 = vcmp.ge.f32.partialorder %v223, 0.0
    %vm240 = vcmp.ge.f32.partialorder %v225, 0.0
    %vm241 = vcmp.ge.f32.partialorder %v229, 0.0
    %vm242 = vcmp.ge.f32.partialorder %v231, 0.0
    %vm243 = vcmp.ge.f32.partialorder %v233, 0.0
    %vm244 = vcmp.ge.f32.partialorder %v235, 0.0
    %v245 = vmul.f32 %v219, 0.2
    %v246 = vmul.f32 %v221, 0.2
    %v247 = vmul.f32 %v223, 0.2
    %v248 = vmul.f32 %v225, 0.2
    %v249 = vmul.f32 %v229, 0.2
    %v250 = vmul.f32 %v231, 0.2
    %v251 = vmul.f32 %v233, 0.2
    %v252 = vmul.f32 %v235, 0.2
    %v253 = vsel %vm237, %v219, %v245
    %v254 = vsel %vm238, %v221, %v246
    %v255 = vsel %vm239, %v223, %v247
    %v256 = vsel %vm240, %v225, %v248
    %v257 = vsel %vm241, %v229, %v249
    %v258 = vsel %vm242, %v231, %v250
    %v259 = vsel %vm243, %v233, %v251
    %v260 = vsel %vm244, %v235, %v252
    %v261 = vpack.c.bf16 %v255, %v253
    %v262 = vpack.c.bf16 %v256, %v254
    %v263 = vpack.c.bf16 %v259, %v257
    %v264 = vpack.c.bf16 %v260, %v258
    %266 = vset.pattern.permute.xlu0 0
    %267 = vperm.xlu0 %266, %v42
    %v268 = vpop.permute.xlu0 %267
    %271 = vset.pattern.permute.xlu0 0
    %272 = vperm.xlu0 %271, %v43
    %v273 = vpop.permute.xlu0 %272
    %276 = vset.pattern.permute.xlu0 0
    %277 = vperm.xlu0 %276, %v44
    %v278 = vpop.permute.xlu0 %277
    %281 = vset.pattern.permute.xlu0 0
    %282 = vperm.xlu0 %281, %v45
    %v283 = vpop.permute.xlu0 %282
    %v289 = vunpack.c.l.b16 %v38
    %v290 = vunpack.c.l.b16 %v39
    %v291 = vunpack.c.l.b16 %v40
    %v292 = vunpack.c.l.b16 %v41
    %v293 = vpack.c.b16 %v290, %v289
    %v294 = vpack.c.b16 %v292, %v291
    %vm295 = vcmask 261120
    %v297 = vsel %vm295, %v293, 0
    %v300 = vsel %vm295, %v294, 0
    %302 = vmatprep.subr.bf16.mxu0 %v262
    %303 = vmatpush1.bf16.msra.mxu0 %v261
    %304 = vmatprep.subr.bf16.mxu0 %v264
    %305 = vmatpush1.bf16.msra.mxu0 %v263
    %306 = vmatprep.subr.bf16.mxu0 0
    %307 = vmatpush1.bf16.msra.mxu0 0
    %308 = vmatprep.subr.bf16.mxu0 0
    %309 = vmatpush1.bf16.msra.mxu0 0
    %310 = vmatprep.subr.bf16.mxu0 0
    %311 = vmatpush1.bf16.msra.mxu0 0
    %312 = vmatprep.subr.bf16.mxu0 0
    %313 = vmatpush1.bf16.msra.mxu0 0
    %314 = vmatprep.subr.bf16.mxu0 0
    %315 = vmatpush1.bf16.msra.mxu0 0
    %316 = vmatprep.subr.bf16.mxu0 0
    %317 = vmatpush1.bf16.msra.mxu0 0
    %318 = vmatprep.subr.bf16.mxu0 0
    %319 = vmatpush1.bf16.msra.mxu0 0
    %320 = vmatprep.subr.bf16.mxu0 0
    %321 = vmatpush1.bf16.msra.mxu0 0
    %322 = vmatprep.subr.bf16.mxu0 0
    %323 = vmatpush1.bf16.msra.mxu0 0
    %324 = vmatprep.subr.bf16.mxu0 0
    %325 = vmatpush1.bf16.msra.mxu0 0
    %326 = vmatprep.subr.bf16.mxu0 0
    %327 = vmatpush1.bf16.msra.mxu0 0
    %328 = vmatprep.subr.bf16.mxu0 0
    %329 = vmatpush1.bf16.msra.mxu0 0
    %330 = vmatprep.subr.bf16.mxu0 0
    %331 = vmatpush1.bf16.msra.mxu0 0
    %332 = vmatprep.subr.bf16.mxu0 0
    %333 = vmatpush1.bf16.msra.mxu0 0
    %334 = vmatprep.mubr.bf16.mxu0 0
    %335 = vmatmul.mubr.bf16.gmra.mrb[0].mxu0 %v297
    %v336 = vpop.f32.mrb[0].mxu0
    %v337 = vadd.f32 %v268, %v336
    %v338 = vpop.f32.mrb[0].mxu0
    %v339 = vadd.f32 %v268, %v338
    %v340 = vpop.f32.mrb[0].mxu0
    %v341 = vadd.f32 %v273, %v340
    %v342 = vpop.f32.mrb[0].mxu0
    %v343 = vadd.f32 %v273, %v342
    %344 = vmatprep.mubr.bf16.mxu0 0
    %345 = vmatmul.mubr.bf16.gmra.mrb[0].mxu0 %v300
    %v346 = vpop.f32.mrb[0].mxu0
    %v347 = vadd.f32 %v278, %v346
    %v348 = vpop.f32.mrb[0].mxu0
    %v349 = vadd.f32 %v278, %v348
    %v350 = vpop.f32.mrb[0].mxu0
    %v351 = vadd.f32 %v283, %v350
    %v352 = vpop.f32.mrb[0].mxu0
    %v353 = vadd.f32 %v283, %v352
    %354 = vdwg.mxu0
    %vm355 = vcmp.ge.f32.partialorder %v337, 0.0
    %vm356 = vcmp.ge.f32.partialorder %v339, 0.0
    %vm357 = vcmp.ge.f32.partialorder %v341, 0.0
    %vm358 = vcmp.ge.f32.partialorder %v343, 0.0
    %vm359 = vcmp.ge.f32.partialorder %v347, 0.0
    %vm360 = vcmp.ge.f32.partialorder %v349, 0.0
    %vm361 = vcmp.ge.f32.partialorder %v351, 0.0
    %vm362 = vcmp.ge.f32.partialorder %v353, 0.0
    %v363 = vmul.f32 %v337, 0.2
    %v364 = vmul.f32 %v339, 0.2
    %v365 = vmul.f32 %v341, 0.2
    %v366 = vmul.f32 %v343, 0.2
    %v367 = vmul.f32 %v347, 0.2
    %v368 = vmul.f32 %v349, 0.2
    %v369 = vmul.f32 %v351, 0.2
    %v370 = vmul.f32 %v353, 0.2
    %v371 = vsel %vm355, %v337, %v363
    %v372 = vsel %vm356, %v339, %v364
    %v373 = vsel %vm357, %v341, %v365
    %v374 = vsel %vm358, %v343, %v366
    %v375 = vsel %vm359, %v347, %v367
    %v376 = vsel %vm360, %v349, %v368
    %v377 = vsel %vm361, %v351, %v369
    %v378 = vsel %vm362, %v353, %v370
    %380 = vset.pattern.permute.xlu0 0
    %381 = vperm.xlu0 %380, %v46
    %v382 = vpop.permute.xlu0 %381
    %385 = vset.pattern.permute.xlu0 0
    %386 = vperm.xlu0 %385, %v47
    %v387 = vpop.permute.xlu0 %386
    %390 = vset.pattern.permute.xlu0 0
    %391 = vperm.xlu0 %390, %v48
    %v392 = vpop.permute.xlu0 %391
    %395 = vset.pattern.permute.xlu0 0
    %396 = vperm.xlu0 %395, %v49
    %v397 = vpop.permute.xlu0 %396
    %v399 = vmul.f32 %v371, %v382
    %v400 = vmul.f32 %v372, %v382
    %v401 = vmul.f32 %v373, %v387
    %v402 = vmul.f32 %v374, %v387
    %v403 = vmul.f32 %v375, %v392
    %v404 = vmul.f32 %v376, %v392
    %v405 = vmul.f32 %v377, %v397
    %v406 = vmul.f32 %v378, %v397
    %v407 = vadd.f32 %v399, %v401
    %v408 = vadd.f32 %v407, %v403
    %v409 = vadd.f32 %v408, %v405
    %v410 = vrot.slane %v409, 4
    %v411 = vadd.f32 %v409, %v410
    %v412 = vrot.slane %v411, 2
    %v413 = vadd.f32 %v411, %v412
    %v414 = vrot.slane %v413, 1
    %v415 = vadd.f32 %v413, %v414
    %v416 = vadd.f32 %v400, %v402
    %v417 = vadd.f32 %v416, %v404
    %v418 = vadd.f32 %v417, %v406
    %v419 = vrot.slane %v418, 4
    %v420 = vadd.f32 %v418, %v419
    %v421 = vrot.slane %v420, 2
    %v422 = vadd.f32 %v420, %v421
    %v423 = vrot.slane %v422, 1
    %v424 = vadd.f32 %v422, %v423
    %426 = vset.pattern.permute.xlu0 0
    %427 = vperm.xlu0 %426, %v50
    %v428 = vpop.permute.xlu0 %427
    %v430 = vlaneseq
    %v431 = vshrl.u32 %v430, 7
    %v432 = vsub.s32 0, %v431
    %v433 = vrot.slane %v428, %v432
    %v434 = vadd.f32 %v415, %v433
    %v435 = vadd.f32 %v424, %v433
    %v436 = vsub.f32 0.0, %v434
    %v437 = vsub.f32 0.0, %v435
    %v438 = vmul.f32 %v436, 1.442695
    %v439 = vpow.pop %v438
    %v440 = vmul.f32 %v437, 1.442695
    %v441 = vpow.pop %v440
    %v442 = vadd.f32 %v439, 1.0
    %v443 = vadd.f32 %v441, 1.0
    %v444 = vrcp.pop %v442
    %v445 = vrcp.pop %v443
    %v446 = vmax.f32 %v444, 0.0
    %v447 = vmax.f32 %v445, 0.0
    %v448 = vmin.f32 %v446, 1.0
    %v449 = vmin.f32 %v447, 1.0
    %v452 = vcombine.low %v448, %v449
    %v454 = vunpack.c.l.s4 1966171168
    %v455 = vunpack.c.0.s8 %v454
    %v456 = vlaneseq
    %v457 = vshrl.u32 %v456, 7
    %v458 = vsub.s32 %v455, %v457
    %v459 = vrot.slane %v452, %v458
    %v461 = vunpack.c.l.s4 1966171168
    %v462 = vunpack.c.0.s8 %v461
    %v463 = vlaneseq
    %v464 = vshrl.u32 %v463, 7
    %v465 = vsub.s32 %v462, %v464
    %v466 = vrot.slane %v459, %v465
    %v468 = vlaneseq
    %vm469 = vcmp.ge.s32.totalorder %v468, 0
    %vm470 = vcmp.lt.s32.totalorder %v468, 256
    %vm471 = vmand %vm469, %vm470
    %472 = vst.msk [vmem:[#allocation3] sm:$0x3] %vm471, %v466
    // Predicated region
    $region30: #{tpu_custom_call.1} parent=1 // pred_check
      _
    $region31: #{tpu_custom_call.1} parent=1 // pred_check_branch
      %474 = sbr.rel (0) target = $region33
    $region32: #{tpu_custom_call.1} parent=1 // pred_region
      %s476 = ssub.s32 32, 32
      %477 = vsyncadd [#allocation4], %s476
      %s479 = sshll.u32 [#allocation3], 4
      %s480 = int_to_ptr.vmem [resolvable:$true] %s479
      %482 = dma.vmem_to_hbm [thread:$0]  %s480, 32, %s7, [#allocation4]
    $region33: #{tpu_custom_call.1} parent=1 // pred_fallthru
      _
    // Predicated region
    $region34: #{tpu_custom_call.1} parent=1 // pred_check
      _
    $region35: #{tpu_custom_call.1} parent=1 // pred_check_branch
      %484 = sbr.rel (0) target = $region37
    $region36: #{tpu_custom_call.1} parent=1 // pred_region
      %485 = dma.done [#allocation4], 32
    $region37: #{tpu_custom_call.1} parent=1 // pred_fallthru
      _
    %486 = vsyncpa [#allocation4], 1

</llo_original>
